<compile_context>
chip_gen: v7x
topology: tpu7x:2x2x1
jax: 0.10.0
libtpu: 0.0.40
codegen_flags: <defaults>
</compile_context>

<pallas_src>
import functools
import math

import jax
import jax.numpy as jnp
from jax.experimental import pallas as pl
from jax.experimental.pallas import tpu as pltpu


# ----------------------------------------------------------------------------
# small helpers
# ----------------------------------------------------------------------------
def _cdiv(a, b):
    return -(-a // b)


def _round_up(a, b):
    return _cdiv(a, b) * b


def _chip_info():
    """(physical VMEM bytes, TensorCores per chip) with safe fallbacks."""
    vmem_bytes = 64 * 1024 * 1024          # conservative lower bound (v7x)
    num_tc = 1
    try:
        info = pltpu.get_tpu_info()
        cap = getattr(info, "vmem_capacity_bytes", None)
        if cap:
            vmem_bytes = int(cap)
    except Exception:
        pass
    try:
        kind = jax.devices()[0].device_kind.lower()
        if "v7" in kind:
            num_tc = 2                     # only v7x has 2 TensorCores/chip
    except Exception:
        pass
    return vmem_bytes, num_tc


def _pick_tile(B, S_pad, vmem_est, budget, target_rows, num_tc):
    """Batch rows per grid step.

    Returns TB such that either the grid has a single step (TB == B, no batch
    padding) or TB is a multiple of `tb_align`, which guarantees (a) the 2-D
    mask block's sublane dim is a multiple of 8 and (b) the flattened output
    row TB*S_pad is a multiple of 128 (lane-dense store).
    """
    tb_align = max(8, 128 // math.gcd(S_pad, 128))

    # Largest aligned TB under the VMEM budget, capped by target_rows and B.
    tb = max(1, target_rows // S_pad)
    tb = min(tb, _round_up(B, tb_align))
    tb = max(tb_align, (tb // tb_align) * tb_align)
    while tb > tb_align and vmem_est(tb) > budget:
        tb -= tb_align

    one_step_ok = (B <= tb) and (vmem_est(B) <= budget)
    if num_tc < 2:
        if one_step_ok:
            return B                       # single step, no batch padding
    else:
        # v7x: prefer >= 2 balanced grid steps so both TensorCores get work.
        half = _round_up(_cdiv(B, 2), tb_align)
        if half <= tb and _cdiv(B, half) >= 2 and vmem_est(half) <= budget:
            tb = half
        elif one_step_ok and B <= tb_align:
            return B                       # too small to split usefully

    # Balance steps (minimise padded batch rows) without changing step count.
    g = max(1, _cdiv(B, tb))
    tb = _round_up(_cdiv(B, g), tb_align)
    return max(1, tb)


def _fold_bn(gamma, beta, rmean, rvar, eps=1e-5):
    a = gamma * jax.lax.rsqrt(rvar + eps)
    return a, beta - rmean * a


def fold_params(params):
    """Fold eval-mode BatchNorms into per-channel affine / adjacent Linears."""
    a0, b0 = _fold_bn(*params["bn0"])
    a1, c1 = _fold_bn(*params["bn1"])
    a2, c2 = _fold_bn(*params["bn2"])
    aa, ca = _fold_bn(*params["bna"])
    ap, cp = _fold_bn(*params["bnp"])
    return dict(
        a0=a0, b0=b0,
        w1=params["w1"] * a1[None, :], b1=params["b1"] * a1 + c1,
        w2=params["w2"] * a2[None, :], b2=params["b2"] * a2 + c2,
        wa=params["wa"] * aa[None, :], ba=params["ba"] * aa + ca,
        wp1=params["wp1"] * ap[None, :], bp1=params["bp1"] * ap + cp,
        wp2=params["wp2"], bp2=params["bp2"],
    )


# ----------------------------------------------------------------------------
# Pallas kernel
# ----------------------------------------------------------------------------
def stock_pointnet_kernel(
    x_ref,      # (TB, S, F)  f32
    inv_ref,    # (TB, S)     f32 keep flags: 1.0 = kept stock, 0.0 = masked/pad
    bias_ref,   # (8, P)      f32 packed row vectors (a0,b0,b1,b2,ba,bp1,bp2)
    w1_ref,     # (F, H)      matmul dtype (BN folded)
    w2_ref,     # (H, H)
    wa_ref,     # (2H, Ha)
    wp1_ref,    # (H+Ha, Hp)
    wp2_ref,    # (1, Hp) f32 if squeeze_out else (Hp, O)
    out_ref,    # (1, 1, TB*S) if squeeze_out else (TB*S, O)
    *, squeeze_out, s_valid,
):
    f32 = jnp.float32
    TB, S, F = x_ref.shape
    H = w1_ref.shape[1]
    Ha = wa_ref.shape[1]
    Hp = wp1_ref.shape[1]
    mm = w1_ref.dtype

    def silu(v):
        # x * sigmoid(x); sigmoid in tanh form rides the EUP slot (no divide).
        return v * (0.5 * jnp.tanh(0.5 * v) + 0.5)

    x = x_ref[...].reshape(TB * S, F)      # leading-dim merge (S % 8 == 0)
    inv = inv_ref[...]                     # (TB, S)

    a0 = bias_ref[0:1, :F]
    b0 = bias_ref[1:2, :F]
    b1 = bias_ref[2:3, :H]
    b2 = bias_ref[3:4, :H]
    ba = bias_ref[4:5, :Ha]
    bp1 = bias_ref[5:6, :Hp]

    # --- feature extractor (input BN folded to affine; layer BNs into W/b)
    h = x * a0 + b0
    h = silu(jnp.dot(h.astype(mm), w1_ref[...], preferred_element_type=f32) + b1)
    h = silu(jnp.dot(h.astype(mm), w2_ref[...], preferred_element_type=f32) + b2)

    # --- masked max / mean pooling over stocks (masked stocks contribute 0 to
    #     the max, exactly as the torch module; padded stock slots excluded)
    h3 = h.reshape(TB, S, H)
    masked = h3 * inv[:, :, None]
    if S > s_valid:  # stock axis was padded to a multiple of 8
        col = jax.lax.broadcasted_iota(jnp.int32, (TB, S, 1), 1)
        padbias = jnp.where(col >= s_valid, -1e9, 0.0).astype(f32)
        gmax = jnp.max(masked + padbias, axis=1)               # (TB, H)
    else:
        gmax = jnp.max(masked, axis=1)
    gsum = jnp.sum(masked, axis=1)                              # (TB, H)
    cnt = jnp.maximum(jnp.sum(inv, axis=1, keepdims=True), 1e-6)  # (TB, 1)
    r = pl.reciprocal(cnt, approx=True)
    r = r * (2.0 - cnt * r)               # one Newton step -> ~f32-exact
    gmean = gsum * r

    # --- global aggregator: Linear(cat([gmax, gmean])) as split matmul
    g = silu(jnp.dot(gmax.astype(mm), wa_ref[:H, :], preferred_element_type=f32)
             + jnp.dot(gmean.astype(mm), wa_ref[H:, :], preferred_element_type=f32)
             + ba)                                              # (TB, Ha)

    # --- predictor layer 1: Linear(cat([h, g_repeated])) as split matmul
    ph = jnp.dot(h.astype(mm), wp1_ref[:H, :], preferred_element_type=f32)
    pg = jnp.dot(g.astype(mm), wp1_ref[H:, :], preferred_element_type=f32)
    p = silu(ph.reshape(TB, S, Hp) + pg[:, None, :] + bp1)      # (TB, S, Hp)

    if squeeze_out:
        # output_dim == 1: final Linear(Hp -> 1) as a lane reduction, stored as
        # one lane-dense (1, 1, TB*S) row.
        w_last = wp2_ref[...].astype(f32)                       # (1, Hp)
        b_last = bias_ref[6:7, 0:1]                             # (1, 1)
        y = jnp.sum(p * w_last[None, :, :], axis=-1) + b_last   # (TB, S)
        out_ref[...] = (5.0 * jnp.tanh(y)).reshape(1, 1, TB * S).astype(out_ref.dtype)
    else:
        O = wp2_ref.shape[1]
        bp2 = bias_ref[6:7, :O]
        y = jnp.dot(p.reshape(TB * S, Hp).astype(mm), wp2_ref[...],
                    preferred_element_type=f32) + bp2
        out_ref[...] = (5.0 * jnp.tanh(y)).astype(out_ref.dtype)


# ----------------------------------------------------------------------------
# Wrapper: folding, tiling, pallas_call
# ----------------------------------------------------------------------------
@functools.partial(jax.jit, static_argnames=("matmul_dtype", "target_rows"))
def stock_pointnet_forward(x, mask, params, matmul_dtype=jnp.bfloat16,
                           target_rows=2048):
    f32 = jnp.float32
    B, S, F = x.shape
    fp = fold_params(params)
    H = fp["w1"].shape[1]
    Ha = fp["wa"].shape[1]
    Hp = fp["wp1"].shape[1]
    O = fp["wp2"].shape[1]
    assert fp["wa"].shape[0] == 2 * H and fp["wp1"].shape[0] == H + Ha
    squeeze_out = (O == 1)

    S_pad = _round_up(S, 8)
    mm_bytes = jnp.dtype(matmul_dtype).itemsize
    vmem_cap, num_tc = _chip_info()
    vmem_limit = max(32 * 1024 * 1024, (vmem_cap * 3) // 4)
    budget = (vmem_limit * 4) // 5        # headroom for compiler scratch

    # --- lane/sublane-padded VMEM estimate for one grid step
    F_l = _round_up(F, 128)
    H_l = _round_up(H, 128)
    Ha_l = _round_up(Ha, 128)
    Hp_l = _round_up(Hp, 128)
    O_l = _round_up(max(O, 1), 128)
    S_l = _round_up(S_pad, 128)
    sub = 16 if mm_bytes < 4 else 8
    w_bytes = ((_round_up(F, sub) * H_l + _round_up(H, sub) * H_l
                + _round_up(2 * H, sub) * Ha_l + _round_up(H + Ha, sub) * Hp_l
                + _round_up(Hp, sub) * O_l) * mm_bytes
               + 8 * _round_up(max(F, H, Ha, Hp, O), 128) * 4)

    def vmem_est(tb):
        rows = tb * S_pad
        x_blk = tb * S_pad * F_l * 4
        inv_blk = _round_up(tb, 8) * S_l * 4
        if squeeze_out:
            out_blk = 8 * _round_up(rows, 128) * 4
        else:
            out_blk = rows * O_l * 4
        temps = rows * (F_l + 3 * H_l + 2 * Hp_l) * 4
        return 2 * (x_blk + inv_blk + out_blk) + 2 * w_bytes + temps

    TB = _pick_tile(B, S_pad, vmem_est, budget, target_rows, num_tc)
    G = _cdiv(B, TB)
    B_pad = G * TB
    R = TB * S_pad

    # ---- inputs: pad only when actually required (avoids an extra HBM copy)
    inv = 1.0 - mask.astype(f32)                               # (B, S)
    pad_b, pad_s = B_pad - B, S_pad - S
    if pad_b or pad_s:
        x_in = jnp.pad(x.astype(f32), ((0, pad_b), (0, pad_s), (0, 0)))
        inv_in = jnp.pad(inv, ((0, pad_b), (0, pad_s)))
    else:
        x_in = x.astype(f32)
        inv_in = inv

    # ---- pack the small row vectors into a single (8, P) tile
    P = max(F, H, Ha, Hp, O)
    rows = []
    for vec in (fp["a0"], fp["b0"], fp["b1"], fp["b2"], fp["ba"], fp["bp1"], fp["bp2"]):
        rows.append(jnp.pad(vec.astype(f32), (0, P - vec.shape[0])))
    rows.append(jnp.zeros((P,), f32))
    bias_pack = jnp.stack(rows)                                 # (8, P)

    # ---- weights (matmul dtype); concat-weights stacked, sliced in-kernel
    md = matmul_dtype
    w1c = fp["w1"].astype(md)
    w2c = fp["w2"].astype(md)
    wac = fp["wa"].astype(md)
    wp1c = fp["wp1"].astype(md)
    if squeeze_out:
        wp2_in = fp["wp2"].reshape(1, Hp).astype(f32)           # VPU lane reduce
        wp2_block = (1, Hp)
        out_shape = jax.ShapeDtypeStruct((G, 1, R), f32)
        out_spec = pl.BlockSpec((1, 1, R), lambda b: (b, 0, 0))
    else:
        wp2_in = fp["wp2"].astype(md)
        wp2_block = (Hp, O)
        out_shape = jax.ShapeDtypeStruct((B_pad * S_pad, O), f32)
        out_spec = pl.BlockSpec((R, O), lambda b: (b, 0))

    in_specs = [
        pl.BlockSpec((TB, S_pad, F), lambda b: (b, 0, 0)),      # x (streamed)
        pl.BlockSpec((TB, S_pad), lambda b: (b, 0)),            # keep flags
        pl.BlockSpec((8, P), lambda b: (0, 0)),                 # bias pack
        pl.BlockSpec((F, H), lambda b: (0, 0)),
        pl.BlockSpec((H, H), lambda b: (0, 0)),
        pl.BlockSpec((2 * H, Ha), lambda b: (0, 0)),
        pl.BlockSpec((H + Ha, Hp), lambda b: (0, 0)),
        pl.BlockSpec(wp2_block, lambda b: (0, 0)),
    ]

    out_raw = pl.pallas_call(
        functools.partial(stock_pointnet_kernel,
                          squeeze_out=squeeze_out, s_valid=S),
        out_shape=out_shape,
        grid=(G,),
        in_specs=in_specs,
        out_specs=out_spec,
        compiler_params=pltpu.CompilerParams(
            dimension_semantics=("parallel",),
            vmem_limit_bytes=int(vmem_limit),
        ),
    )(x_in, inv_in, bias_pack, w1c, w2c, wac, wp1c, wp2_in)

    if squeeze_out:
        out = out_raw.reshape(B_pad, S_pad)[:B, :S][..., None]
    else:
        out = out_raw.reshape(B_pad, S_pad, O)[:B, :S, :]
    return out


# ----------------------------------------------------------------------------
# Pure-JAX references for validation
# ----------------------------------------------------------------------------
def reference_module(x, mask, params, eps=1e-5):
    """Module-faithful eval-mode forward, f32 matmuls at HIGHEST precision."""
    f32 = jnp.float32
    hi = jax.lax.Precision.HIGHEST
    mm = lambda a, w: jnp.dot(a, w, precision=hi)
    silu = lambda v: v * jax.nn.sigmoid(v)
    bn = lambda v, g, b, rm, rv: (v - rm) * jax.lax.rsqrt(rv + eps) * g + b
    inv = (1.0 - mask.astype(f32))[:, :, None]
    h = bn(x, *params["bn0"])
    h = silu(bn(mm(h, params["w1"]) + params["b1"], *params["bn1"]))
    h = silu(bn(mm(h, params["w2"]) + params["b2"], *params["bn2"]))
    masked = h * inv
    gmax = jnp.max(masked, axis=1)
    gmean = jnp.sum(masked, axis=1) / jnp.maximum(jnp.sum(inv, axis=1), 1e-6)
    gf = jnp.concatenate([gmax, gmean], axis=-1)
    g = silu(bn(mm(gf, params["wa"]) + params["ba"], *params["bna"]))
    gr = jnp.broadcast_to(g[:, None, :], (x.shape[0], x.shape[1], g.shape[-1]))
    cat = jnp.concatenate([h, gr], axis=-1)
    p = silu(bn(mm(cat, params["wp1"]) + params["bp1"], *params["bnp"]))
    return 5.0 * jnp.tanh(mm(p, params["wp2"]) + params["bp2"])


def reference_folded(x, mask, fp, matmul_dtype):
    """Mirrors the kernel math (BN folded, matmul operands in matmul_dtype,
    f32 accumulation, final layer in f32)."""
    f32 = jnp.float32
    md = matmul_dtype
    mm = lambda a, w: jnp.dot(a.astype(md), w.astype(md), preferred_element_type=f32)
    silu = lambda v: v * jax.nn.sigmoid(v)
    H = fp["w1"].shape[1]
    inv = (1.0 - mask.astype(f32))[:, :, None]
    h = x.astype(f32) * fp["a0"] + fp["b0"]
    h = silu(mm(h, fp["w1"]) + fp["b1"])
    h = silu(mm(h, fp["w2"]) + fp["b2"])
    masked = h * inv
    gmax = jnp.max(masked, axis=1)
    gmean = jnp.sum(masked, axis=1) / jnp.maximum(jnp.sum(inv, axis=1), 1e-6)
    g = silu(mm(gmax, fp["wa"][:H]) + mm(gmean, fp["wa"][H:]) + fp["ba"])
    p = silu(mm(h, fp["wp1"][:H]) + mm(g, fp["wp1"][H:])[:, None, :] + fp["bp1"])
    y = jnp.dot(p, fp["wp2"], preferred_element_type=f32) + fp["bp2"]
    return 5.0 * jnp.tanh(y)


# ----------------------------------------------------------------------------
# Deterministic synthetic parameters (shapes follow the module __init__)
# ----------------------------------------------------------------------------
def init_params(key, F, H, Ha, O):
    def bn(k, n):
        k1, k2, k3, k4 = jax.random.split(k, 4)
        gamma = 1.0 + 0.1 * jax.random.normal(k1, (n,), jnp.float32)
        beta = 0.1 * jax.random.normal(k2, (n,), jnp.float32)
        rmean = 0.1 * jax.random.normal(k3, (n,), jnp.float32)
        rvar = jax.random.uniform(k4, (n,), jnp.float32, 0.5, 1.5)
        return (gamma, beta, rmean, rvar)

    def lin(k, din, dout):
        k1, k2 = jax.random.split(k)
        w = jax.random.normal(k1, (din, dout), jnp.float32) / jnp.sqrt(din)
        b = 0.1 * jax.random.normal(k2, (dout,), jnp.float32)
        return w, b

    ks = jax.random.split(key, 10)
    p = {}
    p["bn0"] = bn(ks[0], F)
    p["w1"], p["b1"] = lin(ks[1], F, H)
    p["bn1"] = bn(ks[2], H)
    p["w2"], p["b2"] = lin(ks[3], H, H)
    p["bn2"] = bn(ks[4], H)
    p["wa"], p["ba"] = lin(ks[5], 2 * H, Ha)
    p["bna"] = bn(ks[6], Ha)
    p["wp1"], p["bp1"] = lin(ks[7], H + Ha, H)   # predictor hidden = H
    p["bnp"] = bn(ks[8], H)
    p["wp2"], p["bp2"] = lin(ks[9], H, O)
    return p


if __name__ == "__main__":
    # Small shapes consistent with the module: batch=2, num_stocks=8,
    # input_features=16, hidden_dims_extractor=[32, 32],
    # hidden_dims_aggregator=[32], output_dim=1, use_embeddings=False.
    B, S, F, H, Ha, O = 2, 8, 16, 32, 32, 1

    key = jax.random.PRNGKey(0)
    kx, km, kp = jax.random.split(key, 3)
    x = jax.random.normal(kx, (B, S, F), jnp.float32)
    mask = jax.random.bernoulli(km, 0.25, (B, S))          # True = masked out
    params = init_params(kp, F, H, Ha, O)

    # Default (bf16 matmul operands, f32 accumulation) vs like-for-like reference.
    out = jax.block_until_ready(stock_pointnet_forward(x, mask, params))
    assert out.shape == (B, S, O)
    ref_mixed = reference_folded(x, mask, fold_params(params), jnp.bfloat16)
    d_mixed = float(jnp.max(jnp.abs(out - ref_mixed)))
    assert jnp.allclose(out, ref_mixed, atol=1e-2, rtol=1e-2), f"bf16 path diff {d_mixed}"

    # f32 matmul path vs the module-faithful f32 reference (semantics check).
    out32 = jax.block_until_ready(
        stock_pointnet_forward(x, mask, params, matmul_dtype=jnp.float32))
    ref32 = reference_module(x, mask, params)
    d32 = float(jnp.max(jnp.abs(out32 - ref32)))
    assert jnp.allclose(out32, ref32, atol=2e-3, rtol=2e-3), f"f32 path diff {d32}"

    print("KERNEL_OK")
</pallas_src>

<mosaic_0001>
module attributes {stable_mosaic.version = 11 : i64} {
  func.func @stock_pointnet_kernel(%arg0: i32, %arg1: memref<2x8x16xf32, #tpu.memory_space<vmem>>, %arg2: memref<2x8xf32, #tpu.memory_space<vmem>>, %arg3: memref<8x32xf32, #tpu.memory_space<vmem>>, %arg4: memref<16x32xbf16, #tpu.memory_space<vmem>>, %arg5: memref<32x32xbf16, #tpu.memory_space<vmem>>, %arg6: memref<64x32xbf16, #tpu.memory_space<vmem>>, %arg7: memref<64x32xbf16, #tpu.memory_space<vmem>>, %arg8: memref<1x32xf32, #tpu.memory_space<vmem>>, %arg9: memref<1x1x16xf32, #tpu.memory_space<vmem>>) attributes {dimension_semantics = [#tpu.dimension_semantics<parallel>], iteration_bounds = array<i64: 1>, scalar_prefetch = 0 : i64, scratch_operands = 0 : i64, tpu.core_type = #tpu.core_type<tc>, window_params = [{transform_indices = @transform_0, window_bounds = array<i64: 2, 8, 16>}, {transform_indices = @transform_1, window_bounds = array<i64: 2, 8>}, {pipeline_mode = #tpu.pipeline_mode<synchronous>, transform_indices = @transform_2, window_bounds = array<i64: 8, 32>}, {pipeline_mode = #tpu.pipeline_mode<synchronous>, transform_indices = @transform_3, window_bounds = array<i64: 16, 32>}, {pipeline_mode = #tpu.pipeline_mode<synchronous>, transform_indices = @transform_4, window_bounds = array<i64: 32, 32>}, {pipeline_mode = #tpu.pipeline_mode<synchronous>, transform_indices = @transform_5, window_bounds = array<i64: 64, 32>}, {pipeline_mode = #tpu.pipeline_mode<synchronous>, transform_indices = @transform_6, window_bounds = array<i64: 64, 32>}, {pipeline_mode = #tpu.pipeline_mode<synchronous>, transform_indices = @transform_7, window_bounds = array<i64: 1, 32>}, {transform_indices = @transform_8, window_bounds = array<i64: 1, 1, 16>}]} {
    %c0 = arith.constant 0 : index
    %c0_0 = arith.constant 0 : index
    %c0_1 = arith.constant 0 : index
    %0 = vector.load %arg1[%c0, %c0_0, %c0_1] : memref<2x8x16xf32, #tpu.memory_space<vmem>>, vector<2x8x16xf32>
    %1 = vector.shape_cast %0 : vector<2x8x16xf32> to vector<16x16xf32>
    %c0_2 = arith.constant 0 : index
    %c0_3 = arith.constant 0 : index
    %2 = vector.load %arg2[%c0_2, %c0_3] : memref<2x8xf32, #tpu.memory_space<vmem>>, vector<2x8xf32>
    %c0_4 = arith.constant 0 : index
    %c0_5 = arith.constant 0 : index
    %3 = vector.load %arg3[%c0_4, %c0_5] : memref<8x32xf32, #tpu.memory_space<vmem>>, vector<1x16xf32>
    %c1 = arith.constant 1 : index
    %c0_6 = arith.constant 0 : index
    %4 = vector.load %arg3[%c1, %c0_6] : memref<8x32xf32, #tpu.memory_space<vmem>>, vector<1x16xf32>
    %c2 = arith.constant 2 : index
    %c0_7 = arith.constant 0 : index
    %5 = vector.load %arg3[%c2, %c0_7] : memref<8x32xf32, #tpu.memory_space<vmem>>, vector<1x32xf32>
    %c3 = arith.constant 3 : index
    %c0_8 = arith.constant 0 : index
    %6 = vector.load %arg3[%c3, %c0_8] : memref<8x32xf32, #tpu.memory_space<vmem>>, vector<1x32xf32>
    %c4 = arith.constant 4 : index
    %c0_9 = arith.constant 0 : index
    %7 = vector.load %arg3[%c4, %c0_9] : memref<8x32xf32, #tpu.memory_space<vmem>>, vector<1x32xf32>
    %c5 = arith.constant 5 : index
    %c0_10 = arith.constant 0 : index
    %8 = vector.load %arg3[%c5, %c0_10] : memref<8x32xf32, #tpu.memory_space<vmem>>, vector<1x32xf32>
    %9 = vector.broadcast %3 : vector<1x16xf32> to vector<16x16xf32>
    %10 = arith.mulf %1, %9 : vector<16x16xf32>
    %11 = vector.broadcast %4 : vector<1x16xf32> to vector<16x16xf32>
    %12 = arith.addf %10, %11 : vector<16x16xf32>
    %13 = arith.truncf %12 : vector<16x16xf32> to vector<16x16xbf16>
    %c0_11 = arith.constant 0 : index
    %c0_12 = arith.constant 0 : index
    %14 = vector.load %arg4[%c0_11, %c0_12] : memref<16x32xbf16, #tpu.memory_space<vmem>>, vector<16x32xbf16>
    %cst = arith.constant dense<0.000000e+00> : vector<16x32xf32>
    %15 = tpu.matmul %13, %14, %cst {dimension_numbers = #tpu.dot_dimension_numbers<[1], [0], [0], [1], [0, 0, 1, 1], [], []>} : vector<16x16xbf16>, vector<16x32xbf16>, vector<16x32xf32> -> vector<16x32xf32>
    %16 = vector.broadcast %5 : vector<1x32xf32> to vector<16x32xf32>
    %17 = arith.addf %15, %16 : vector<16x32xf32>
    %cst_13 = arith.constant 5.000000e-01 : f32
    %18 = vector.broadcast %cst_13 : f32 to vector<16x32xf32>
    %19 = arith.mulf %18, %17 : vector<16x32xf32>
    %20 = math.tanh %19 : vector<16x32xf32>
    %cst_14 = arith.constant 5.000000e-01 : f32
    %21 = vector.broadcast %cst_14 : f32 to vector<16x32xf32>
    %22 = arith.mulf %21, %20 : vector<16x32xf32>
    %cst_15 = arith.constant 5.000000e-01 : f32
    %23 = vector.broadcast %cst_15 : f32 to vector<16x32xf32>
    %24 = arith.addf %22, %23 : vector<16x32xf32>
    %25 = arith.mulf %17, %24 : vector<16x32xf32>
    %26 = arith.truncf %25 : vector<16x32xf32> to vector<16x32xbf16>
    %c0_16 = arith.constant 0 : index
    %c0_17 = arith.constant 0 : index
    %27 = vector.load %arg5[%c0_16, %c0_17] : memref<32x32xbf16, #tpu.memory_space<vmem>>, vector<32x32xbf16>
    %cst_18 = arith.constant dense<0.000000e+00> : vector<16x32xf32>
    %28 = tpu.matmul %26, %27, %cst_18 {dimension_numbers = #tpu.dot_dimension_numbers<[1], [0], [0], [1], [0, 0, 1, 1], [], []>} : vector<16x32xbf16>, vector<32x32xbf16>, vector<16x32xf32> -> vector<16x32xf32>
    %29 = vector.broadcast %6 : vector<1x32xf32> to vector<16x32xf32>
    %30 = arith.addf %28, %29 : vector<16x32xf32>
    %cst_19 = arith.constant 5.000000e-01 : f32
    %31 = vector.broadcast %cst_19 : f32 to vector<16x32xf32>
    %32 = arith.mulf %31, %30 : vector<16x32xf32>
    %33 = math.tanh %32 : vector<16x32xf32>
    %cst_20 = arith.constant 5.000000e-01 : f32
    %34 = vector.broadcast %cst_20 : f32 to vector<16x32xf32>
    %35 = arith.mulf %34, %33 : vector<16x32xf32>
    %cst_21 = arith.constant 5.000000e-01 : f32
    %36 = vector.broadcast %cst_21 : f32 to vector<16x32xf32>
    %37 = arith.addf %35, %36 : vector<16x32xf32>
    %38 = arith.mulf %30, %37 : vector<16x32xf32>
    %39 = vector.shape_cast %38 : vector<16x32xf32> to vector<2x8x32xf32>
    %40 = vector.shape_cast %2 : vector<2x8xf32> to vector<2x8x1xf32>
    %41 = vector.broadcast %40 : vector<2x8x1xf32> to vector<2x8x32xf32>
    %42 = arith.mulf %39, %41 : vector<2x8x32xf32>
    %cst_22 = arith.constant dense<0xFF800000> : vector<2x32xf32>
    %43 = vector.multi_reduction <maximumf>, %42, %cst_22 [1] : vector<2x8x32xf32> to vector<2x32xf32>
    %cst_23 = arith.constant dense<0.000000e+00> : vector<2x32xf32>
    %44 = vector.multi_reduction <add>, %42, %cst_23 [1] : vector<2x8x32xf32> to vector<2x32xf32>
    %cst_24 = arith.constant dense<0.000000e+00> : vector<2xf32>
    %45 = vector.multi_reduction <add>, %2, %cst_24 [1] : vector<2x8xf32> to vector<2xf32>
    %46 = vector.shape_cast %45 : vector<2xf32> to vector<2x1xf32>
    %cst_25 = arith.constant 9.99999997E-7 : f32
    %47 = vector.broadcast %cst_25 : f32 to vector<2x1xf32>
    %48 = arith.maximumf %46, %47 : vector<2x1xf32>
    %49 = tpu.reciprocal %48 {approx = true} : vector<2x1xf32> -> vector<2x1xf32>
    %50 = arith.mulf %48, %49 : vector<2x1xf32>
    %cst_26 = arith.constant 2.000000e+00 : f32
    %51 = vector.broadcast %cst_26 : f32 to vector<2x1xf32>
    %52 = arith.subf %51, %50 : vector<2x1xf32>
    %53 = arith.mulf %49, %52 : vector<2x1xf32>
    %54 = vector.broadcast %53 : vector<2x1xf32> to vector<2x32xf32>
    %55 = arith.mulf %44, %54 : vector<2x32xf32>
    %56 = arith.truncf %43 : vector<2x32xf32> to vector<2x32xbf16>
    %c0_27 = arith.constant 0 : index
    %c0_28 = arith.constant 0 : index
    %57 = vector.load %arg6[%c0_27, %c0_28] : memref<64x32xbf16, #tpu.memory_space<vmem>>, vector<32x32xbf16>
    %cst_29 = arith.constant dense<0.000000e+00> : vector<2x32xf32>
    %58 = tpu.matmul %56, %57, %cst_29 {dimension_numbers = #tpu.dot_dimension_numbers<[1], [0], [0], [1], [0, 0, 1, 1], [], []>} : vector<2x32xbf16>, vector<32x32xbf16>, vector<2x32xf32> -> vector<2x32xf32>
    %59 = arith.truncf %55 : vector<2x32xf32> to vector<2x32xbf16>
    %c32 = arith.constant 32 : index
    %c0_30 = arith.constant 0 : index
    %60 = vector.load %arg6[%c32, %c0_30] : memref<64x32xbf16, #tpu.memory_space<vmem>>, vector<32x32xbf16>
    %cst_31 = arith.constant dense<0.000000e+00> : vector<2x32xf32>
    %61 = tpu.matmul %59, %60, %cst_31 {dimension_numbers = #tpu.dot_dimension_numbers<[1], [0], [0], [1], [0, 0, 1, 1], [], []>} : vector<2x32xbf16>, vector<32x32xbf16>, vector<2x32xf32> -> vector<2x32xf32>
    %62 = arith.addf %58, %61 : vector<2x32xf32>
    %63 = vector.broadcast %7 : vector<1x32xf32> to vector<2x32xf32>
    %64 = arith.addf %62, %63 : vector<2x32xf32>
    %cst_32 = arith.constant 5.000000e-01 : f32
    %65 = vector.broadcast %cst_32 : f32 to vector<2x32xf32>
    %66 = arith.mulf %65, %64 : vector<2x32xf32>
    %67 = math.tanh %66 : vector<2x32xf32>
    %cst_33 = arith.constant 5.000000e-01 : f32
    %68 = vector.broadcast %cst_33 : f32 to vector<2x32xf32>
    %69 = arith.mulf %68, %67 : vector<2x32xf32>
    %cst_34 = arith.constant 5.000000e-01 : f32
    %70 = vector.broadcast %cst_34 : f32 to vector<2x32xf32>
    %71 = arith.addf %69, %70 : vector<2x32xf32>
    %72 = arith.mulf %64, %71 : vector<2x32xf32>
    %73 = arith.truncf %38 : vector<16x32xf32> to vector<16x32xbf16>
    %c0_35 = arith.constant 0 : index
    %c0_36 = arith.constant 0 : index
    %74 = vector.load %arg7[%c0_35, %c0_36] : memref<64x32xbf16, #tpu.memory_space<vmem>>, vector<32x32xbf16>
    %cst_37 = arith.constant dense<0.000000e+00> : vector<16x32xf32>
    %75 = tpu.matmul %73, %74, %cst_37 {dimension_numbers = #tpu.dot_dimension_numbers<[1], [0], [0], [1], [0, 0, 1, 1], [], []>} : vector<16x32xbf16>, vector<32x32xbf16>, vector<16x32xf32> -> vector<16x32xf32>
    %76 = arith.truncf %72 : vector<2x32xf32> to vector<2x32xbf16>
    %c32_38 = arith.constant 32 : index
    %c0_39 = arith.constant 0 : index
    %77 = vector.load %arg7[%c32_38, %c0_39] : memref<64x32xbf16, #tpu.memory_space<vmem>>, vector<32x32xbf16>
    %cst_40 = arith.constant dense<0.000000e+00> : vector<2x32xf32>
    %78 = tpu.matmul %76, %77, %cst_40 {dimension_numbers = #tpu.dot_dimension_numbers<[1], [0], [0], [1], [0, 0, 1, 1], [], []>} : vector<2x32xbf16>, vector<32x32xbf16>, vector<2x32xf32> -> vector<2x32xf32>
    %79 = vector.shape_cast %75 : vector<16x32xf32> to vector<2x8x32xf32>
    %80 = vector.shape_cast %78 : vector<2x32xf32> to vector<2x1x32xf32>
    %81 = vector.broadcast %80 : vector<2x1x32xf32> to vector<2x8x32xf32>
    %82 = arith.addf %79, %81 : vector<2x8x32xf32>
    %83 = vector.shape_cast %8 : vector<1x32xf32> to vector<1x1x32xf32>
    %84 = vector.broadcast %83 : vector<1x1x32xf32> to vector<2x8x32xf32>
    %85 = arith.addf %82, %84 : vector<2x8x32xf32>
    %cst_41 = arith.constant 5.000000e-01 : f32
    %86 = vector.broadcast %cst_41 : f32 to vector<2x8x32xf32>
    %87 = arith.mulf %86, %85 : vector<2x8x32xf32>
    %88 = math.tanh %87 : vector<2x8x32xf32>
    %cst_42 = arith.constant 5.000000e-01 : f32
    %89 = vector.broadcast %cst_42 : f32 to vector<2x8x32xf32>
    %90 = arith.mulf %89, %88 : vector<2x8x32xf32>
    %cst_43 = arith.constant 5.000000e-01 : f32
    %91 = vector.broadcast %cst_43 : f32 to vector<2x8x32xf32>
    %92 = arith.addf %90, %91 : vector<2x8x32xf32>
    %93 = arith.mulf %85, %92 : vector<2x8x32xf32>
    %c0_44 = arith.constant 0 : index
    %c0_45 = arith.constant 0 : index
    %94 = vector.load %arg8[%c0_44, %c0_45] : memref<1x32xf32, #tpu.memory_space<vmem>>, vector<1x32xf32>
    %c6 = arith.constant 6 : index
    %c0_46 = arith.constant 0 : index
    %95 = vector.load %arg3[%c6, %c0_46] : memref<8x32xf32, #tpu.memory_space<vmem>>, vector<1x1xf32>
    %96 = vector.shape_cast %94 : vector<1x32xf32> to vector<1x1x32xf32>
    %97 = vector.broadcast %96 : vector<1x1x32xf32> to vector<2x8x32xf32>
    %98 = arith.mulf %93, %97 : vector<2x8x32xf32>
    %cst_47 = arith.constant dense<0.000000e+00> : vector<2x8xf32>
    %99 = vector.multi_reduction <add>, %98, %cst_47 [2] : vector<2x8x32xf32> to vector<2x8xf32>
    %100 = vector.broadcast %95 : vector<1x1xf32> to vector<2x8xf32>
    %101 = arith.addf %99, %100 : vector<2x8xf32>
    %102 = math.tanh %101 : vector<2x8xf32>
    %cst_48 = arith.constant 5.000000e+00 : f32
    %103 = vector.broadcast %cst_48 : f32 to vector<2x8xf32>
    %104 = arith.mulf %103, %102 : vector<2x8xf32>
    %105 = vector.shape_cast %104 : vector<2x8xf32> to vector<1x1x16xf32>
    %c0_49 = arith.constant 0 : index
    %c0_50 = arith.constant 0 : index
    %c0_51 = arith.constant 0 : index
    %106 = vector.load %arg9[%c0_49, %c0_50, %c0_51] : memref<1x1x16xf32, #tpu.memory_space<vmem>>, vector<1x1x16xf32>
    tpu.vector_store %arg9[%c0_49, %c0_50, %c0_51], %105 {strides = array<i32>} : memref<1x1x16xf32, #tpu.memory_space<vmem>>, vector<1x1x16xf32>,
    return
  }
  func.func @transform_0(%arg0: i32) -> (i32, i32, i32) {
    %c0_i32 = arith.constant 0 : i32
    %c0_i32_0 = arith.constant 0 : i32
    %c0_i32_1 = arith.constant 0 : i32
    return %arg0, %c0_i32, %c0_i32_0 : i32, i32, i32
  }
  func.func @transform_1(%arg0: i32) -> (i32, i32) {
    %c0_i32 = arith.constant 0 : i32
    %c0_i32_0 = arith.constant 0 : i32
    return %arg0, %c0_i32 : i32, i32
  }
  func.func @transform_2(%arg0: i32) -> (i32, i32) {
    %c0_i32 = arith.constant 0 : i32
    %c0_i32_0 = arith.constant 0 : i32
    %c0_i32_1 = arith.constant 0 : i32
    return %c0_i32, %c0_i32_0 : i32, i32
  }
  func.func @transform_3(%arg0: i32) -> (i32, i32) {
    %c0_i32 = arith.constant 0 : i32
    %c0_i32_0 = arith.constant 0 : i32
    %c0_i32_1 = arith.constant 0 : i32
    return %c0_i32, %c0_i32_0 : i32, i32
  }
  func.func @transform_4(%arg0: i32) -> (i32, i32) {
    %c0_i32 = arith.constant 0 : i32
    %c0_i32_0 = arith.constant 0 : i32
    %c0_i32_1 = arith.constant 0 : i32
    return %c0_i32, %c0_i32_0 : i32, i32
  }
  func.func @transform_5(%arg0: i32) -> (i32, i32) {
    %c0_i32 = arith.constant 0 : i32
    %c0_i32_0 = arith.constant 0 : i32
    %c0_i32_1 = arith.constant 0 : i32
    return %c0_i32, %c0_i32_0 : i32, i32
  }
  func.func @transform_6(%arg0: i32) -> (i32, i32) {
    %c0_i32 = arith.constant 0 : i32
    %c0_i32_0 = arith.constant 0 : i32
    %c0_i32_1 = arith.constant 0 : i32
    return %c0_i32, %c0_i32_0 : i32, i32
  }
  func.func @transform_7(%arg0: i32) -> (i32, i32) {
    %c0_i32 = arith.constant 0 : i32
    %c0_i32_0 = arith.constant 0 : i32
    %c0_i32_1 = arith.constant 0 : i32
    return %c0_i32, %c0_i32_0 : i32, i32
  }
  func.func @transform_8(%arg0: i32) -> (i32, i32, i32) {
    %c0_i32 = arith.constant 0 : i32
    %c0_i32_0 = arith.constant 0 : i32
    %c0_i32_1 = arith.constant 0 : i32
    return %arg0, %c0_i32, %c0_i32_0 : i32, i32, i32
  }
}

</mosaic_0001>

<llo_original>
// kernel: stock_pointnet_forward.1
$region0: #{stock_pointnet_forward.1}
  #allocation0 [shape = 'u32[]', space=smem, size = 0x4, offset = 0x4, fixed_abs, tag = 'smem constant byte address 0x4 - core index']
  #allocation1 [shape = 'u32[144,128]{1,0:T(1,128)}', space=vmem, size = 0x12000, scoped, tag = 'internal scratch']
  %s0 = inlined_call_operand.vmem [shape: f32[2,8,16], index: 0, kind: input, shape index: {}]
  %s1 = inlined_call_operand.vmem [shape: f32[2,8], index: 1, kind: input, shape index: {}]
  %s2 = inlined_call_operand.vmem [shape: f32[8,32], index: 2, kind: input, shape index: {}]
  %s3 = inlined_call_operand.vmem [shape: bf16[16,32], index: 3, kind: input, shape index: {}]
  %s4 = inlined_call_operand.vmem [shape: bf16[32,32], index: 4, kind: input, shape index: {}]
  %s5 = inlined_call_operand.vmem [shape: bf16[64,32], index: 5, kind: input, shape index: {}]
  %s6 = inlined_call_operand.vmem [shape: bf16[64,32], index: 6, kind: input, shape index: {}]
  %s7 = inlined_call_operand.vmem [shape: f32[1,32], index: 7, kind: input, shape index: {}]
  %s8 = inlined_call_operand.vmem [shape: f32[1,1,16], index: 8, kind: output, shape index: {}]
  %s9 = sld [smem:[#allocation0]]
  $region42: #{stock_pointnet_forward.1} parent=0
    _
  %s11 = ssub.s32 1, %s9
  %s12 = scalar_select 0, %s11, %s9
  // Predicated region
  $region2: #{stock_pointnet_forward.1} parent=0 // pred_check
    _
  $region3: #{stock_pointnet_forward.1} parent=0 // pred_check_branch
    %14 = sbr.rel (0) target = $region5
  $region4: #{stock_pointnet_forward.1} parent=0 // pred_region
    _
  $region5: #{stock_pointnet_forward.1} parent=0 // pred_fallthru
    _
  // Predicated region
  $region6: #{stock_pointnet_forward.1} parent=0 // pred_check
    _
  $region7: #{stock_pointnet_forward.1} parent=0 // pred_check_branch
    %16 = sbr.rel (0) target = $region9
  $region8: #{stock_pointnet_forward.1} parent=0 // pred_region
    _
  $region9: #{stock_pointnet_forward.1} parent=0 // pred_fallthru
    _
  // Predicated region
  $region10: #{stock_pointnet_forward.1} parent=0 // pred_check
    _
  $region11: #{stock_pointnet_forward.1} parent=0 // pred_check_branch
    %18 = sbr.rel (0) target = $region13
  $region12: #{stock_pointnet_forward.1} parent=0 // pred_region
    _
  $region13: #{stock_pointnet_forward.1} parent=0 // pred_fallthru
    _
  // Predicated region
  $region14: #{stock_pointnet_forward.1} parent=0 // pred_check
    _
  $region15: #{stock_pointnet_forward.1} parent=0 // pred_check_branch
    %20 = sbr.rel (0) target = $region17
  $region16: #{stock_pointnet_forward.1} parent=0 // pred_region
    _
  $region17: #{stock_pointnet_forward.1} parent=0 // pred_fallthru
    _
  // Predicated region
  $region18: #{stock_pointnet_forward.1} parent=0 // pred_check
    _
  $region19: #{stock_pointnet_forward.1} parent=0 // pred_check_branch
    %22 = sbr.rel (0) target = $region21
  $region20: #{stock_pointnet_forward.1} parent=0 // pred_region
    _
  $region21: #{stock_pointnet_forward.1} parent=0 // pred_fallthru
    _
  // Predicated region
  $region22: #{stock_pointnet_forward.1} parent=0 // pred_check
    _
  $region23: #{stock_pointnet_forward.1} parent=0 // pred_check_branch
    %24 = sbr.rel (0) target = $region25
  $region24: #{stock_pointnet_forward.1} parent=0 // pred_region
    _
  $region25: #{stock_pointnet_forward.1} parent=0 // pred_fallthru
    _
  // Predicated region
  $region26: #{stock_pointnet_forward.1} parent=0 // pred_check
    _
  $region27: #{stock_pointnet_forward.1} parent=0 // pred_check_branch
    %26 = sbr.rel (0) target = $region29
  $region28: #{stock_pointnet_forward.1} parent=0 // pred_region
    _
  $region29: #{stock_pointnet_forward.1} parent=0 // pred_fallthru
    _
  // Predicated region
  $region30: #{stock_pointnet_forward.1} parent=0 // pred_check
    _
  $region31: #{stock_pointnet_forward.1} parent=0 // pred_check_branch
    %28 = sbr.rel (0) target = $region33
  $region32: #{stock_pointnet_forward.1} parent=0 // pred_region
    _
  $region33: #{stock_pointnet_forward.1} parent=0 // pred_fallthru
    _
  %v30 = vld [vmem:[%s0] sm:$0xff]
  %v31 = vld [vmem:[%s0 + $0x8] sm:$0xff]
  %v32 = vld [vmem:[%s1] sm:$0x3]
  %v33 = vld [vmem:[%s2] sm:$0x1]
  %v34 = vld [vmem:[%s2 + $0x1] sm:$0x1]
  %v35 = vld [vmem:[%s2 + $0x2] sm:$0x1]
  %v36 = vld [vmem:[%s2 + $0x3] sm:$0x1]
  %v37 = vld [vmem:[%s2 + $0x4] sm:$0x1]
  %v38 = vld [vmem:[%s2 + $0x5] sm:$0x1]
  %v39 = vlaneseq
  %v40 = vshrl.u32 %v39, 7
  %v41 = vsub.s32 0, %v40
  %v42 = vrot.slane %v33, %v41
  %v43 = vmul.f32 %v30, %v42
  %v44 = vmul.f32 %v31, %v42
  %v45 = vlaneseq
  %v46 = vshrl.u32 %v45, 7
  %v47 = vsub.s32 0, %v46
  %v48 = vrot.slane %v34, %v47
  %v49 = vadd.f32 %v43, %v48
  %v50 = vadd.f32 %v44, %v48
  %v51 = vpack.c.bf16 %v50, %v49
  %v52 = vld [vmem:[%s3] sm:$0xf]
  %v53 = vld [vmem:[%s3 + $0x4] sm:$0xf]
  %v54 = vlaneseq
  %v55 = vshrl.u32 %v54, 7
  %v56 = vsub.s32 0, %v55
  %v57 = vrot.slane %v35, %v56
  %v60 = vunpack.c.l.b16 %v52
  %v61 = vunpack.c.l.b16 %v53
  %v62 = vpack.c.b16 %v61, %v60
  %vm64 = vcmask 130048
  %v66 = vsel %vm64, %v51, 0
  %68 = vmatprep.subr.bf16.mxu0 0
  %69 = vmatpush1.bf16.msra.mxu0 %v62
  %70 = vmatprep.subr.bf16.mxu0 0
  %71 = vmatpush1.bf16.msra.mxu0 0
  %72 = vmatprep.subr.bf16.mxu0 0
  %73 = vmatpush1.bf16.msra.mxu0 0
  %74 = vmatprep.subr.bf16.mxu0 0
  %75 = vmatpush1.bf16.msra.mxu0 0
  %76 = vmatprep.subr.bf16.mxu0 0
  %77 = vmatpush1.bf16.msra.mxu0 0
  %78 = vmatprep.subr.bf16.mxu0 0
  %79 = vmatpush1.bf16.msra.mxu0 0
  %80 = vmatprep.subr.bf16.mxu0 0
  %81 = vmatpush1.bf16.msra.mxu0 0
  %82 = vmatprep.subr.bf16.mxu0 0
  %83 = vmatpush1.bf16.msra.mxu0 0
  %84 = vmatprep.subr.bf16.mxu0 0
  %85 = vmatpush1.bf16.msra.mxu0 0
  %86 = vmatprep.subr.bf16.mxu0 0
  %87 = vmatpush1.bf16.msra.mxu0 0
  %88 = vmatprep.subr.bf16.mxu0 0
  %89 = vmatpush1.bf16.msra.mxu0 0
  %90 = vmatprep.subr.bf16.mxu0 0
  %91 = vmatpush1.bf16.msra.mxu0 0
  %92 = vmatprep.subr.bf16.mxu0 0
  %93 = vmatpush1.bf16.msra.mxu0 0
  %94 = vmatprep.subr.bf16.mxu0 0
  %95 = vmatpush1.bf16.msra.mxu0 0
  %96 = vmatprep.subr.bf16.mxu0 0
  %97 = vmatpush1.bf16.msra.mxu0 0
  %98 = vmatprep.subr.bf16.mxu0 0
  %99 = vmatpush1.bf16.msra.mxu0 0
  %100 = vmatprep.mubr.bf16.mxu0 0
  %101 = vmatmul.mubr.bf16.gmra.mrb[0].mxu0 %v66
  %v102 = vpop.f32.mrb[0].mxu0
  %v103 = vadd.f32 %v57, %v102
  %v104 = vpop.f32.mrb[0].mxu0
  %v105 = vpop.f32.mrb[0].mxu0
  %v106 = vadd.f32 %v57, %v105
  %v107 = vpop.f32.mrb[0].mxu0
  %108 = vdwg.mxu0
  %v109 = vmul.f32 %v103, 0.5
  %v110 = vmul.f32 %v106, 0.5
  %v111 = vtanh.pop %v109
  %v112 = vtanh.pop %v110
  %v113 = vmul.f32 %v111, 0.5
  %v114 = vmul.f32 %v112, 0.5
  %v115 = vadd.f32 %v113, 0.5
  %v116 = vadd.f32 %v114, 0.5
  %v117 = vmul.f32 %v103, %v115
  %v118 = vmul.f32 %v106, %v116
  %v119 = vpack.c.bf16 %v118, %v117
  %v120 = vld [vmem:[%s4] sm:$0xf]
  %v121 = vld [vmem:[%s4 + $0x4] sm:$0xf]
  %v122 = vld [vmem:[%s4 + $0x8] sm:$0xf]
  %v123 = vld [vmem:[%s4 + $0xc] sm:$0xf]
  %v124 = vlaneseq
  %v125 = vshrl.u32 %v124, 7
  %v126 = vsub.s32 0, %v125
  %v127 = vrot.slane %v36, %v126
  %v132 = vunpack.c.l.b16 %v120
  %v133 = vunpack.c.l.b16 %v121
  %v134 = vunpack.c.l.b16 %v122
  %v135 = vunpack.c.l.b16 %v123
  %v136 = vpack.c.b16 %v133, %v132
  %v137 = vpack.c.b16 %v135, %v134
  %vm140 = vcmask 261120
  %v142 = vsel %vm140, %v119, 0
  %144 = vmatprep.subr.bf16.mxu0 0
  %145 = vmatpush1.bf16.msra.mxu0 %v136
  %146 = vmatprep.subr.bf16.mxu0 0
  %147 = vmatpush1.bf16.msra.mxu0 %v137
  %148 = vmatprep.subr.bf16.mxu0 0
  %149 = vmatpush1.bf16.msra.mxu0 0
  %150 = vmatprep.subr.bf16.mxu0 0
  %151 = vmatpush1.bf16.msra.mxu0 0
  %152 = vmatprep.subr.bf16.mxu0 0
  %153 = vmatpush1.bf16.msra.mxu0 0
  %154 = vmatprep.subr.bf16.mxu0 0
  %155 = vmatpush1.bf16.msra.mxu0 0
  %156 = vmatprep.subr.bf16.mxu0 0
  %157 = vmatpush1.bf16.msra.mxu0 0
  %158 = vmatprep.subr.bf16.mxu0 0
  %159 = vmatpush1.bf16.msra.mxu0 0
  %160 = vmatprep.subr.bf16.mxu0 0
  %161 = vmatpush1.bf16.msra.mxu0 0
  %162 = vmatprep.subr.bf16.mxu0 0
  %163 = vmatpush1.bf16.msra.mxu0 0
  %164 = vmatprep.subr.bf16.mxu0 0
  %165 = vmatpush1.bf16.msra.mxu0 0
  %166 = vmatprep.subr.bf16.mxu0 0
  %167 = vmatpush1.bf16.msra.mxu0 0
  %168 = vmatprep.subr.bf16.mxu0 0
  %169 = vmatpush1.bf16.msra.mxu0 0
  %170 = vmatprep.subr.bf16.mxu0 0
  %171 = vmatpush1.bf16.msra.mxu0 0
  %172 = vmatprep.subr.bf16.mxu0 0
  %173 = vmatpush1.bf16.msra.mxu0 0
  %174 = vmatprep.subr.bf16.mxu0 0
  %175 = vmatpush1.bf16.msra.mxu0 0
  %176 = vmatprep.mubr.bf16.mxu0 0
  %177 = vmatmul.mubr.bf16.gmra.mrb[0].mxu0 %v142
  %v178 = vpop.f32.mrb[0].mxu0
  %v179 = vadd.f32 %v127, %v178
  %v180 = vpop.f32.mrb[0].mxu0
  %v181 = vpop.f32.mrb[0].mxu0
  %v182 = vadd.f32 %v127, %v181
  %v183 = vpop.f32.mrb[0].mxu0
  %184 = vdwg.mxu0
  %v185 = vmul.f32 %v179, 0.5
  %v186 = vmul.f32 %v182, 0.5
  %v187 = vtanh.pop %v185
  %v188 = vtanh.pop %v186
  %v189 = vmul.f32 %v187, 0.5
  %v190 = vmul.f32 %v188, 0.5
  %v191 = vadd.f32 %v189, 0.5
  %v192 = vadd.f32 %v190, 0.5
  %v193 = vmul.f32 %v179, %v191
  %v194 = vmul.f32 %v182, %v192
  %v195 = vlaneseq
  %v196 = vshrl.u32 %v195, 7
  %v197 = vsub.s32 0, %v196
  %v198 = vrot.slane %v32, %v197
  %200 = vbcast.lane.b32.xlu0 %v198, 256
  %v201 = vpop.permute.xlu0 %200
  %v202 = vlaneseq
  %v203 = vshrl.u32 %v202, 7
  %v204 = vsub.s32 1, %v203
  %v205 = vrot.slane %v32, %v204
  %207 = vbcast.lane.b32.xlu0 %v205, 256
  %v208 = vpop.permute.xlu0 %207
  %v209 = vmul.f32 %v193, %v201
  %v210 = vmul.f32 %v194, %v208
  %v211 = vsel %vm140, %v209, -inf
  %v212 = vrot.slane %v211, 4
  %v213 = vmax.f32 %v211, %v212
  %v214 = vrot.slane %v213, 2
  %v215 = vmax.f32 %v213, %v214
  %v216 = vrot.slane %v215, 1
  %v217 = vmax.f32 %v215, %v216
  %v218 = vsel %vm140, %v210, -inf
  %v219 = vrot.slane %v218, 4
  %v220 = vmax.f32 %v218, %v219
  %v221 = vrot.slane %v220, 2
  %v222 = vmax.f32 %v220, %v221
  %v223 = vrot.slane %v222, 1
  %v224 = vmax.f32 %v222, %v223
  %v225 = vsel %vm140, %v209, 0.0
  %v226 = vrot.slane %v225, 4
  %v227 = vadd.f32 %v225, %v226
  %v228 = vrot.slane %v227, 2
  %v229 = vadd.f32 %v227, %v228
  %v230 = vrot.slane %v229, 1
  %v231 = vadd.f32 %v229, %v230
  %v232 = vsel %vm140, %v210, 0.0
  %v233 = vrot.slane %v232, 4
  %v234 = vadd.f32 %v232, %v233
  %v235 = vrot.slane %v234, 2
  %v236 = vadd.f32 %v234, %v235
  %v237 = vrot.slane %v236, 1
  %v238 = vadd.f32 %v236, %v237
  %vm239 = vcmask 58368
  %v240 = vsel %vm239, %v32, 0.0
  %241 = vadd.xlane.f32.xlu0 %v240
  %v242 = vpop.xlane.xlu0 %241
  %v243 = vmax.f32 %v242, 1e-06
  %v244 = vrcp.pop %v243
  %v245 = vmul.f32 %v243, %v244
  %v246 = vsub.f32 2.0, %v245
  %v247 = vmul.f32 %v244, %v246
  %v249 = vrot.slane %v247, 1
  %v252 = vmul.f32 %v231, %v247
  %v253 = vmul.f32 %v238, %v249
  %v254 = vpack.c.bf16 %v217, %v217
  %v255 = vpack.c.bf16 %v224, %v224
  %v256 = vld [vmem:[%s5] sm:$0xf]
  %v257 = vld [vmem:[%s5 + $0x4] sm:$0xf]
  %v258 = vld [vmem:[%s5 + $0x8] sm:$0xf]
  %v259 = vld [vmem:[%s5 + $0xc] sm:$0xf]
  %v260 = vpack.c.bf16 %v252, %v252
  %v261 = vpack.c.bf16 %v253, %v253
  %v262 = vld [vmem:[%s5 + $0x10] sm:$0xf]
  %v263 = vld [vmem:[%s5 + $0x14] sm:$0xf]
  %v264 = vld [vmem:[%s5 + $0x18] sm:$0xf]
  %v265 = vld [vmem:[%s5 + $0x1c] sm:$0xf]
  %v268 = vunpack.c.l.b16 %v260
  %v269 = vunpack.c.l.b16 %v261
  %v270 = vrot.slane %v269, 7
  %vm271 = vcmask 1041409
  %v272 = vsel %vm271, %v270, %v268
  %v273 = vpack.c.b16 %v272, %v272
  %v278 = vunpack.c.l.b16 %v262
  %v279 = vunpack.c.l.b16 %v263
  %v280 = vunpack.c.l.b16 %v264
  %v281 = vunpack.c.l.b16 %v265
  %v282 = vpack.c.b16 %v279, %v278
  %v283 = vpack.c.b16 %v281, %v280
  %v287 = vsel %vm140, %v273, 0
  %289 = vmatprep.subr.bf16.mxu0 0
  %290 = vmatpush1.bf16.msra.mxu0 %v282
  %291 = vmatprep.subr.bf16.mxu0 0
  %292 = vmatpush1.bf16.msra.mxu0 %v283
  %293 = vmatprep.subr.bf16.mxu0 0
  %294 = vmatpush1.bf16.msra.mxu0 0
  %295 = vmatprep.subr.bf16.mxu0 0
  %296 = vmatpush1.bf16.msra.mxu0 0
  %297 = vmatprep.subr.bf16.mxu0 0
  %298 = vmatpush1.bf16.msra.mxu0 0
  %299 = vmatprep.subr.bf16.mxu0 0
  %300 = vmatpush1.bf16.msra.mxu0 0
  %301 = vmatprep.subr.bf16.mxu0 0
  %302 = vmatpush1.bf16.msra.mxu0 0
  %303 = vmatprep.subr.bf16.mxu0 0
  %304 = vmatpush1.bf16.msra.mxu0 0
  %305 = vmatprep.subr.bf16.mxu0 0
  %306 = vmatpush1.bf16.msra.mxu0 0
  %307 = vmatprep.subr.bf16.mxu0 0
  %308 = vmatpush1.bf16.msra.mxu0 0
  %309 = vmatprep.subr.bf16.mxu0 0
  %310 = vmatpush1.bf16.msra.mxu0 0
  %311 = vmatprep.subr.bf16.mxu0 0
  %312 = vmatpush1.bf16.msra.mxu0 0
  %313 = vmatprep.subr.bf16.mxu0 0
  %314 = vmatpush1.bf16.msra.mxu0 0
  %315 = vmatprep.subr.bf16.mxu0 0
  %316 = vmatpush1.bf16.msra.mxu0 0
  %317 = vmatprep.subr.bf16.mxu0 0
  %318 = vmatpush1.bf16.msra.mxu0 0
  %319 = vmatprep.subr.bf16.mxu0 0
  %320 = vmatpush1.bf16.msra.mxu0 0
  %321 = vmatprep.mubr.bf16.mxu0 0
  %322 = vmatmul.mubr.bf16.gmra.mrb[0].mxu0 %v287
  %v323 = vpop.f32.mrb[0].mxu0
  %v324 = vadd.f32 0.0, %v323
  %v325 = vpop.f32.mrb[0].mxu0
  %v326 = vpop.f32.mrb[0].mxu0
  %v327 = vpop.f32.mrb[0].mxu0
  %328 = vdwg.mxu0
  %v331 = vunpack.c.l.b16 %v254
  %v332 = vunpack.c.l.b16 %v255
  %v333 = vsel %vm271, %v332, %v331
  %v334 = vpack.c.b16 %v333, %v333
  %v339 = vunpack.c.l.b16 %v256
  %v340 = vunpack.c.l.b16 %v257
  %v341 = vunpack.c.l.b16 %v258
  %v342 = vunpack.c.l.b16 %v259
  %v343 = vpack.c.b16 %v340, %v339
  %v344 = vpack.c.b16 %v342, %v341
  %v348 = vsel %vm140, %v334, 0
  %350 = vmatprep.subr.bf16.mxu0 0
  %351 = vmatpush1.bf16.msra.mxu0 %v343
  %352 = vmatprep.subr.bf16.mxu0 0
  %353 = vmatpush1.bf16.msra.mxu0 %v344
  %354 = vmatprep.subr.bf16.mxu0 0
  %355 = vmatpush1.bf16.msra.mxu0 0
  %356 = vmatprep.subr.bf16.mxu0 0
  %357 = vmatpush1.bf16.msra.mxu0 0
  %358 = vmatprep.subr.bf16.mxu0 0
  %359 = vmatpush1.bf16.msra.mxu0 0
  %360 = vmatprep.subr.bf16.mxu0 0
  %361 = vmatpush1.bf16.msra.mxu0 0
  %362 = vmatprep.subr.bf16.mxu0 0
  %363 = vmatpush1.bf16.msra.mxu0 0
  %364 = vmatprep.subr.bf16.mxu0 0
  %365 = vmatpush1.bf16.msra.mxu0 0
  %366 = vmatprep.subr.bf16.mxu0 0
  %367 = vmatpush1.bf16.msra.mxu0 0
  %368 = vmatprep.subr.bf16.mxu0 0
  %369 = vmatpush1.bf16.msra.mxu0 0
  %370 = vmatprep.subr.bf16.mxu0 0
  %371 = vmatpush1.bf16.msra.mxu0 0
  %372 = vmatprep.subr.bf16.mxu0 0
  %373 = vmatpush1.bf16.msra.mxu0 0
  %374 = vmatprep.subr.bf16.mxu0 0
  %375 = vmatpush1.bf16.msra.mxu0 0
  %376 = vmatprep.subr.bf16.mxu0 0
  %377 = vmatpush1.bf16.msra.mxu0 0
  %378 = vmatprep.subr.bf16.mxu0 0
  %379 = vmatpush1.bf16.msra.mxu0 0
  %380 = vmatprep.subr.bf16.mxu0 0
  %381 = vmatpush1.bf16.msra.mxu0 0
  %382 = vmatprep.mubr.bf16.mxu0 0
  %383 = vmatmul.mubr.bf16.gmra.mrb[0].mxu0 %v348
  %v384 = vpop.f32.mrb[0].mxu0
  %v385 = vadd.f32 %v324, %v384
  %v386 = vpop.f32.mrb[0].mxu0
  %v387 = vpop.f32.mrb[0].mxu0
  %v388 = vpop.f32.mrb[0].mxu0
  %389 = vdwg.mxu0
  %v390 = vlaneseq
  %v391 = vshrl.u32 %v390, 7
  %v392 = vsub.s32 0, %v391
  %v393 = vrot.slane %v37, %v392
  %v394 = vadd.f32 %v385, %v393
  %v395 = vmul.f32 %v394, 0.5
  %v396 = vtanh.pop %v395
  %v397 = vmul.f32 %v396, 0.5
  %v398 = vadd.f32 %v397, 0.5
  %v399 = vmul.f32 %v394, %v398
  %v400 = vpack.c.bf16 %v194, %v193
  %v401 = vld [vmem:[%s6] sm:$0xf]
  %v402 = vld [vmem:[%s6 + $0x4] sm:$0xf]
  %v403 = vld [vmem:[%s6 + $0x8] sm:$0xf]
  %v404 = vld [vmem:[%s6 + $0xc] sm:$0xf]
  %v409 = vunpack.c.l.b16 %v401
  %v410 = vunpack.c.l.b16 %v402
  %v411 = vunpack.c.l.b16 %v403
  %v412 = vunpack.c.l.b16 %v404
  %v413 = vpack.c.b16 %v410, %v409
  %v414 = vpack.c.b16 %v412, %v411
  %v418 = vsel %vm140, %v400, 0
  %420 = vmatprep.subr.bf16.mxu0 0
  %421 = vmatpush1.bf16.msra.mxu0 %v413
  %422 = vmatprep.subr.bf16.mxu0 0
  %423 = vmatpush1.bf16.msra.mxu0 %v414
  %424 = vmatprep.subr.bf16.mxu0 0
  %425 = vmatpush1.bf16.msra.mxu0 0
  %426 = vmatprep.subr.bf16.mxu0 0
  %427 = vmatpush1.bf16.msra.mxu0 0
  %428 = vmatprep.subr.bf16.mxu0 0
  %429 = vmatpush1.bf16.msra.mxu0 0
  %430 = vmatprep.subr.bf16.mxu0 0
  %431 = vmatpush1.bf16.msra.mxu0 0
  %432 = vmatprep.subr.bf16.mxu0 0
  %433 = vmatpush1.bf16.msra.mxu0 0
  %434 = vmatprep.subr.bf16.mxu0 0
  %435 = vmatpush1.bf16.msra.mxu0 0
  %436 = vmatprep.subr.bf16.mxu0 0
  %437 = vmatpush1.bf16.msra.mxu0 0
  %438 = vmatprep.subr.bf16.mxu0 0
  %439 = vmatpush1.bf16.msra.mxu0 0
  %440 = vmatprep.subr.bf16.mxu0 0
  %441 = vmatpush1.bf16.msra.mxu0 0
  %442 = vmatprep.subr.bf16.mxu0 0
  %443 = vmatpush1.bf16.msra.mxu0 0
  %444 = vmatprep.subr.bf16.mxu0 0
  %445 = vmatpush1.bf16.msra.mxu0 0
  %446 = vmatprep.subr.bf16.mxu0 0
  %447 = vmatpush1.bf16.msra.mxu0 0
  %448 = vmatprep.subr.bf16.mxu0 0
  %449 = vmatpush1.bf16.msra.mxu0 0
  %450 = vmatprep.subr.bf16.mxu0 0
  %451 = vmatpush1.bf16.msra.mxu0 0
  %452 = vmatprep.mubr.bf16.mxu0 0
  %453 = vmatmul.mubr.bf16.gmra.mrb[0].mxu0 %v418
  %v454 = vpop.f32.mrb[0].mxu0
  %v455 = vadd.f32 0.0, %v454
  %v456 = vpop.f32.mrb[0].mxu0
  %v457 = vpop.f32.mrb[0].mxu0
  %v458 = vadd.f32 0.0, %v457
  %v459 = vpop.f32.mrb[0].mxu0
  %460 = vdwg.mxu0
  %v461 = vpack.c.bf16 %v399, %v399
  %v462 = vld [vmem:[%s6 + $0x10] sm:$0xf]
  %v463 = vld [vmem:[%s6 + $0x14] sm:$0xf]
  %v464 = vld [vmem:[%s6 + $0x18] sm:$0xf]
  %v465 = vld [vmem:[%s6 + $0x1c] sm:$0xf]
  %v470 = vunpack.c.l.b16 %v462
  %v471 = vunpack.c.l.b16 %v463
  %v472 = vunpack.c.l.b16 %v464
  %v473 = vunpack.c.l.b16 %v465
  %v474 = vpack.c.b16 %v471, %v470
  %v475 = vpack.c.b16 %v473, %v472
  %v479 = vsel %vm140, %v461, 0
  %481 = vmatprep.subr.bf16.mxu0 0
  %482 = vmatpush1.bf16.msra.mxu0 %v474
  %483 = vmatprep.subr.bf16.mxu0 0
  %484 = vmatpush1.bf16.msra.mxu0 %v475
  %485 = vmatprep.subr.bf16.mxu0 0
  %486 = vmatpush1.bf16.msra.mxu0 0
  %487 = vmatprep.subr.bf16.mxu0 0
  %488 = vmatpush1.bf16.msra.mxu0 0
  %489 = vmatprep.subr.bf16.mxu0 0
  %490 = vmatpush1.bf16.msra.mxu0 0
  %491 = vmatprep.subr.bf16.mxu0 0
  %492 = vmatpush1.bf16.msra.mxu0 0
  %493 = vmatprep.subr.bf16.mxu0 0
  %494 = vmatpush1.bf16.msra.mxu0 0
  %495 = vmatprep.subr.bf16.mxu0 0
  %496 = vmatpush1.bf16.msra.mxu0 0
  %497 = vmatprep.subr.bf16.mxu0 0
  %498 = vmatpush1.bf16.msra.mxu0 0
  %499 = vmatprep.subr.bf16.mxu0 0
  %500 = vmatpush1.bf16.msra.mxu0 0
  %501 = vmatprep.subr.bf16.mxu0 0
  %502 = vmatpush1.bf16.msra.mxu0 0
  %503 = vmatprep.subr.bf16.mxu0 0
  %504 = vmatpush1.bf16.msra.mxu0 0
  %505 = vmatprep.subr.bf16.mxu0 0
  %506 = vmatpush1.bf16.msra.mxu0 0
  %507 = vmatprep.subr.bf16.mxu0 0
  %508 = vmatpush1.bf16.msra.mxu0 0
  %509 = vmatprep.subr.bf16.mxu0 0
  %510 = vmatpush1.bf16.msra.mxu0 0
  %511 = vmatprep.subr.bf16.mxu0 0
  %512 = vmatpush1.bf16.msra.mxu0 0
  %513 = vmatprep.mubr.bf16.mxu0 0
  %514 = vmatmul.mubr.bf16.gmra.mrb[0].mxu0 %v479
  %v515 = vpop.f32.mrb[0].mxu0
  %v516 = vadd.f32 0.0, %v515
  %v517 = vpop.f32.mrb[0].mxu0
  %v518 = vpop.f32.mrb[0].mxu0
  %v519 = vpop.f32.mrb[0].mxu0
  %520 = vdwg.mxu0
  %v523 = vunpack.c.l.s4 1966171168
  %v524 = vunpack.c.0.s8 %v523
  %v525 = vlaneseq
  %v526 = vshrl.u32 %v525, 7
  %v527 = vsub.s32 %v524, %v526
  %v528 = vrot.slane %v516, %v527
  %v529 = vcombine.high %v528, %v528
  %v531 = vunpack.c.l.s4 1966171168
  %v532 = vunpack.c.0.s8 %v531
  %v533 = vlaneseq
  %v534 = vshrl.u32 %v533, 7
  %v535 = vsub.s32 %v532, %v534
  %v536 = vrot.slane %v528, %v535
  %v538 = vunpack.c.l.s4 1966171168
  %v539 = vunpack.c.0.s8 %v538
  %v540 = vlaneseq
  %v541 = vshrl.u32 %v540, 7
  %v542 = vsub.s32 %v539, %v541
  %v543 = vrot.slane %v529, %v542
  %v544 = vlaneseq
  %v545 = vshrl.u32 %v544, 7
  %v546 = vsub.s32 0, %v545
  %v547 = vrot.slane %v536, %v546
  %v548 = vlaneseq
  %v549 = vshrl.u32 %v548, 7
  %v550 = vsub.s32 0, %v549
  %v551 = vrot.slane %v543, %v550
  %v554 = vadd.f32 %v455, %v547
  %v555 = vadd.f32 %v458, %v551
  %v556 = vlaneseq
  %v557 = vshrl.u32 %v556, 7
  %v558 = vsub.s32 0, %v557
  %v559 = vrot.slane %v38, %v558
  %v560 = vadd.f32 %v554, %v559
  %v561 = vadd.f32 %v555, %v559
  %v562 = vmul.f32 %v560, 0.5
  %v563 = vmul.f32 %v561, 0.5
  %v564 = vtanh.pop %v562
  %v565 = vtanh.pop %v563
  %v566 = vmul.f32 %v564, 0.5
  %v567 = vmul.f32 %v565, 0.5
  %v568 = vadd.f32 %v566, 0.5
  %v569 = vadd.f32 %v567, 0.5
  %v570 = vmul.f32 %v560, %v568
  %v571 = vmul.f32 %v561, %v569
  %v572 = vld [vmem:[%s7] sm:$0x1]
  %v573 = vld [vmem:[%s2 + $0x6] sm:$0x1]
  %v575 = vlaneseq
  %v576 = vshrl.u32 %v575, 7
  %v577 = vsub.s32 0, %v576
  %v578 = vrot.slane %v572, %v577
  %v580 = vmul.f32 %v570, %v578
  %v581 = vmul.f32 %v571, %v578
  %v582 = vsel %vm140, %v580, 0.0
  %583 = vadd.xlane.f32.xlu0 %v582
  %v584 = vpop.xlane.xlu0 %583
  %v585 = vsel %vm140, %v581, 0.0
  %586 = vadd.xlane.f32.xlu0 %v585
  %v587 = vpop.xlane.xlu0 %586
  %s589 = vtos %v573
  %v590 = vstv %s589
  %v592 = vadd.f32 %v584, %v590
  %v593 = vadd.f32 %v587, %v590
  %v594 = vtanh.pop %v592
  %v595 = vtanh.pop %v593
  %v596 = vmul.f32 %v594, 5.0
  %v597 = vmul.f32 %v595, 5.0
  %v600 = vlaneseq
  %v601 = vand.u32 %v600, 127
  %v602 = vlaneseq
  %v603 = vshrl.u32 %v602, 7
  %v604 = vsub.s32 %v601, %v603
  %v605 = vrot.slane %v596, %v604
  %v606 = vadd.s32 %v601, 4294967288
  %v607 = vlaneseq
  %v608 = vshrl.u32 %v607, 7
  %v609 = vsub.s32 %v606, %v608
  %v610 = vrot.slane %v597, %v609
  %vm611 = vcmask 130112
  %v612 = vsel %vm611, %v610, %v605
  %vm614 = vcmask 122880
  %615 = vst.msk [vmem:[%s8] sm:$0x1] %vm614, %v612
  // Predicated region
  $region34: #{stock_pointnet_forward.1} parent=0 // pred_check
    _
  $region35: #{stock_pointnet_forward.1} parent=0 // pred_check_branch
    %617 = sbr.rel (0) target = $region37
  $region36: #{stock_pointnet_forward.1} parent=0 // pred_region
    _
  $region37: #{stock_pointnet_forward.1} parent=0 // pred_fallthru
    _
  // Predicated region
  $region38: #{stock_pointnet_forward.1} parent=0 // pred_check
    _
  $region39: #{stock_pointnet_forward.1} parent=0 // pred_check_branch
    %619 = sbr.rel (0) target = $region41
  $region40: #{stock_pointnet_forward.1} parent=0 // pred_region
    _
  $region41: #{stock_pointnet_forward.1} parent=0 // pred_fallthru
    _

</llo_original>
